<compile_context>
chip_gen: v5e
topology: v5e:2x2
jax: 0.10.0
libtpu: 0.0.40
codegen_flags: <defaults>
</compile_context>

<pallas_src>
import functools
import math

import numpy as np
import jax
import jax.numpy as jnp
from jax import lax
from jax.experimental import pallas as pl
from jax.experimental.pallas import tpu as pltpu


def _fused_mha_kernel(x_ref, wqkv_ref, cos_ref, sin_ref, wout_ref, bout_ref,
                      o_ref, *, b, m, d, nh):
    """Whole multi-head RoPE attention + output projection in one grid step."""
    D = nh * d

    # ---- one fused bf16 projection: [q | q_swap | k | k_swap | v] ----------
    x2 = x_ref[...].astype(jnp.bfloat16)                          # (b*m, d)
    qkv = jnp.dot(x2, wqkv_ref[...],                              # (b*m, 5*D)
                  preferred_element_type=jnp.float32)
    qkv = qkv.reshape(b, m, 5 * D)                                # split sublanes only

    # ---- RoPE (lane-dense, all heads at once), f32 elementwise --------------
    # rot(x) = x*cos + swap(x)*sin ; the pair swap (and its sign, and the
    # 1/sqrt(d) score scale for q) are already folded into the weight columns.
    cos = cos_ref[...][None]                                      # (1, m, D)
    sin = sin_ref[...][None]
    q_rot = qkv[..., 0 * D:1 * D] * cos + qkv[..., 1 * D:2 * D] * sin
    k_rot = qkv[..., 2 * D:3 * D] * cos + qkv[..., 3 * D:4 * D] * sin
    v = qkv[..., 4 * D:5 * D]

    # bf16 only at MXU operand boundaries (f32 accumulation everywhere).
    q_bf = q_rot.astype(jnp.bfloat16)
    k_bf = k_rot.astype(jnp.bfloat16)
    v_bf = v.astype(jnp.bfloat16)

    # ---- per-head QK^T scores (MXU), stacked for ONE batched softmax --------
    s = jnp.stack(
        [jnp.einsum('bqd,bkd->bqk',
                    q_bf[..., h * d:(h + 1) * d],
                    k_bf[..., h * d:(h + 1) * d],
                    preferred_element_type=jnp.float32)
         for h in range(nh)],
        axis=0)                                                   # (nh, b, m, m) f32

    row = lax.broadcasted_iota(jnp.int32, (m, m), 0)
    col = lax.broadcasted_iota(jnp.int32, (m, m), 1)
    causal = (col <= row)[None, None]                             # (1, 1, m, m)
    s = jnp.where(causal, s, jnp.float32(-1e30))
    s = s - jnp.max(s, axis=-1, keepdims=True)
    e = jnp.exp(s)
    p_bf = (e * pl.reciprocal(jnp.sum(e, axis=-1, keepdims=True),
                              approx=True)).astype(jnp.bfloat16)  # (nh, b, m, m)

    # ---- per-head PV -> lane-dense concat -> ONE K=D output projection ------
    cat = jnp.concatenate(
        [jnp.einsum('bqk,bkd->bqd', p_bf[h],
                    v_bf[..., h * d:(h + 1) * d],
                    preferred_element_type=jnp.float32)
         for h in range(nh)],
        axis=-1)                                                  # (b, m, D) f32

    out = jnp.dot(cat.reshape(b * m, D).astype(jnp.bfloat16),     # (b*m, D)
                  wout_ref[...],                                  # (D, n_out) bf16
                  preferred_element_type=jnp.float32)             # (b*m, n_out)

    # TODO(synk): attention dropout_p=0.1 and trailing nn.Dropout(0.1) omitted
    # (eval/inference semantics, deterministic kernel).
    o_ref[...] = out + bout_ref[...]                              # full-lane dense store


def rope_masked_multihead_attention(x, wq, wk, wv, w_out, b_out):
    """x: (b, m, d) f32. wq/wk/wv: (n_heads, d, d) with q_h = x @ wq[h].
    w_out: (n_heads*d, d). b_out: (1, d). Returns (b, m, d) f32."""
    b, m, d = x.shape
    nh = wq.shape[0]
    D = nh * d
    n_out = ((d + 127) // 128) * 128          # padded lane-dense output width
    scale = 1.0 / math.sqrt(d)

    def cat_heads(w):                          # (nh, d, d) -> (d, nh*d)
        return jnp.transpose(w, (1, 0, 2)).reshape(d, D)

    def swap_cols(w):
        # Column pair-swap with sign so (x @ swap(W))[2i] = (x@W)[2i+1] and
        # (x @ swap(W))[2i+1] = -(x@W)[2i], matching q_rot = q@R of the module.
        wp = w.reshape(nh, d, d // 2, 2)
        return jnp.stack([wp[..., 1], -wp[..., 0]], axis=-1).reshape(nh, d, d)

    # Fused projection weights: x @ wqkv == [q | q_swap | k | k_swap | v],
    # with 1/sqrt(d) folded into the q columns (RoPE is linear).
    wqkv = jnp.concatenate(
        [cat_heads(wq) * scale,
         cat_heads(swap_cols(wq)) * scale,
         cat_heads(wk),
         cat_heads(swap_cols(wk)),
         cat_heads(wv)],
        axis=-1).astype(jnp.bfloat16)                              # (d, 5*D)

    # RoPE tables, replicating get_rotary_matrix exactly (note the (i-1)).
    i = np.arange(d // 2, dtype=np.float64)
    theta = 10000.0 ** (-2.0 * (i - 1) / d)
    ang = np.arange(m, dtype=np.float64)[:, None] * theta[None, :]   # (m, d/2)
    cos_t = jnp.asarray(np.tile(np.repeat(np.cos(ang), 2, axis=-1),
                                (1, nh)).astype(np.float32))         # (m, D)
    sin_t = jnp.asarray(np.tile(np.repeat(np.sin(ang), 2, axis=-1),
                                (1, nh)).astype(np.float32))

    # Zero-pad W_out / bias to a 128-multiple so the final store is unmasked.
    w_out_p = jnp.zeros((D, n_out), jnp.bfloat16).at[:, :d].set(
        w_out.astype(jnp.bfloat16))
    b_out_p = jnp.zeros((1, n_out), jnp.float32).at[:, :d].set(
        b_out.astype(jnp.float32))

    kernel = functools.partial(_fused_mha_kernel, b=b, m=m, d=d, nh=nh)

    out = pl.pallas_call(
        kernel,
        out_shape=jax.ShapeDtypeStruct((b * m, n_out), jnp.float32),
        grid_spec=pltpu.PrefetchScalarGridSpec(
            num_scalar_prefetch=0,
            grid=(1,),                                   # fully fused: one step
            in_specs=[
                pl.BlockSpec((b * m, d), lambda i: (0, 0)),     # x (flattened)
                pl.BlockSpec((d, 5 * D), lambda i: (0, 0)),     # fused Wqkv (bf16)
                pl.BlockSpec((m, D), lambda i: (0, 0)),         # cos (lane-dense)
                pl.BlockSpec((m, D), lambda i: (0, 0)),         # sin
                pl.BlockSpec((D, n_out), lambda i: (0, 0)),     # W_out (padded, bf16)
                pl.BlockSpec((1, n_out), lambda i: (0, 0)),     # bias (padded)
            ],
            out_specs=pl.BlockSpec((b * m, n_out), lambda i: (0, 0)),
        ),
        compiler_params=pltpu.CompilerParams(
            dimension_semantics=("arbitrary",)),
    )(x.reshape(b * m, d), wqkv, cos_t, sin_t, w_out_p, b_out_p)

    return out[:, :d].reshape(b, m, d)


# ---------------- pure-JAX reference (explicit R matrices, all f32) ----------
def _reference(x, wq, wk, wv, w_out, b_out):
    b, m, d = x.shape
    n_heads = wq.shape[0]
    R = np.zeros((m, d, d), dtype=np.float64)
    for p in range(m):
        for i in range(d // 2):
            theta = 10000.0 ** (-2.0 * (i - 1) / d)
            mt = p * theta
            R[p, 2 * i, 2 * i] = np.cos(mt)
            R[p, 2 * i, 2 * i + 1] = -np.sin(mt)
            R[p, 2 * i + 1, 2 * i] = np.sin(mt)
            R[p, 2 * i + 1, 2 * i + 1] = np.cos(mt)
    R = jnp.asarray(R.astype(np.float32))

    outs = []
    for h in range(n_heads):
        q = x @ wq[h]
        k = x @ wk[h]
        v = x @ wv[h]
        q_rot = jnp.einsum('bml,mlj->bmj', q, R)
        k_rot = jnp.einsum('bml,mlj->bmj', k, R)
        s = jnp.einsum('bqd,bkd->bqk', q_rot, k_rot) / math.sqrt(d)
        mask = np.tril(np.ones((m, m), dtype=bool))
        s = jnp.where(mask[None], s, -jnp.inf)
        p = jax.nn.softmax(s, axis=-1)
        outs.append(jnp.einsum('bqk,bkd->bqd', p, v))
    cat = jnp.concatenate(outs, axis=-1)
    return cat @ w_out + b_out[0]


if __name__ == "__main__":
    # config: d_model=32, context_window >= m, n_heads=4; batch=2, seq=8
    b, m, d, n_heads = 2, 8, 32, 4

    key = jax.random.PRNGKey(0)
    kx, kq, kk, kv, kw, kb = jax.random.split(key, 6)
    x = jax.random.normal(kx, (b, m, d), dtype=jnp.float32)
    wq = jax.random.normal(kq, (n_heads, d, d), dtype=jnp.float32) * 0.05
    wk = jax.random.normal(kk, (n_heads, d, d), dtype=jnp.float32) * 0.05
    wv = jax.random.normal(kv, (n_heads, d, d), dtype=jnp.float32) * 0.05
    w_out = jax.random.normal(kw, (n_heads * d, d), dtype=jnp.float32) * 0.05
    b_out = jax.random.normal(kb, (1, d), dtype=jnp.float32) * 0.05

    out = rope_masked_multihead_attention(x, wq, wk, wv, w_out, b_out)
    out = jax.block_until_ready(out)

    ref = _reference(x, wq, wk, wv, w_out, b_out)
    # bf16 MXU operands (f32 accumulation) + approx reciprocal vs. all-f32
    # reference -> looser tolerance.
    np.testing.assert_allclose(np.asarray(out), np.asarray(ref),
                               rtol=2e-2, atol=2e-2)

    print("KERNEL_OK")
</pallas_src>

<mosaic_0001>
module attributes {stable_mosaic.version = 11 : i64} {
  func.func @_fused_mha_kernel(%arg0: i32, %arg1: memref<16x32xf32, #tpu.memory_space<vmem>>, %arg2: memref<32x640xbf16, #tpu.memory_space<vmem>>, %arg3: memref<8x128xf32, #tpu.memory_space<vmem>>, %arg4: memref<8x128xf32, #tpu.memory_space<vmem>>, %arg5: memref<128x128xbf16, #tpu.memory_space<vmem>>, %arg6: memref<1x128xf32, #tpu.memory_space<vmem>>, %arg7: memref<16x128xf32, #tpu.memory_space<vmem>>) attributes {dimension_semantics = [#tpu.dimension_semantics<arbitrary>], iteration_bounds = array<i64: 1>, scalar_prefetch = 0 : i64, scratch_operands = 0 : i64, tpu.core_type = #tpu.core_type<tc>, window_params = [{pipeline_mode = #tpu.pipeline_mode<synchronous>, transform_indices = @transform_0, window_bounds = array<i64: 16, 32>}, {pipeline_mode = #tpu.pipeline_mode<synchronous>, transform_indices = @transform_1, window_bounds = array<i64: 32, 640>}, {pipeline_mode = #tpu.pipeline_mode<synchronous>, transform_indices = @transform_2, window_bounds = array<i64: 8, 128>}, {pipeline_mode = #tpu.pipeline_mode<synchronous>, transform_indices = @transform_3, window_bounds = array<i64: 8, 128>}, {pipeline_mode = #tpu.pipeline_mode<synchronous>, transform_indices = @transform_4, window_bounds = array<i64: 128, 128>}, {pipeline_mode = #tpu.pipeline_mode<synchronous>, transform_indices = @transform_5, window_bounds = array<i64: 1, 128>}, {pipeline_mode = #tpu.pipeline_mode<synchronous>, transform_indices = @transform_6, window_bounds = array<i64: 16, 128>}]} {
    %c0 = arith.constant 0 : index
    %c0_0 = arith.constant 0 : index
    %0 = vector.load %arg1[%c0, %c0_0] : memref<16x32xf32, #tpu.memory_space<vmem>>, vector<16x32xf32>
    %1 = arith.truncf %0 : vector<16x32xf32> to vector<16x32xbf16>
    %c0_1 = arith.constant 0 : index
    %c0_2 = arith.constant 0 : index
    %2 = vector.load %arg2[%c0_1, %c0_2] : memref<32x640xbf16, #tpu.memory_space<vmem>>, vector<32x640xbf16>
    %cst = arith.constant dense<0.000000e+00> : vector<16x640xf32>
    %3 = tpu.matmul %1, %2, %cst {dimension_numbers = #tpu.dot_dimension_numbers<[1], [0], [0], [1], [0, 0, 1, 1], [], []>} : vector<16x32xbf16>, vector<32x640xbf16>, vector<16x640xf32> -> vector<16x640xf32>
    %4 = vector.shape_cast %3 : vector<16x640xf32> to vector<2x8x640xf32>
    %c0_3 = arith.constant 0 : index
    %c0_4 = arith.constant 0 : index
    %5 = vector.load %arg3[%c0_3, %c0_4] : memref<8x128xf32, #tpu.memory_space<vmem>>, vector<8x128xf32>
    %6 = vector.shape_cast %5 : vector<8x128xf32> to vector<1x8x128xf32>
    %c0_5 = arith.constant 0 : index
    %c0_6 = arith.constant 0 : index
    %7 = vector.load %arg4[%c0_5, %c0_6] : memref<8x128xf32, #tpu.memory_space<vmem>>, vector<8x128xf32>
    %8 = vector.shape_cast %7 : vector<8x128xf32> to vector<1x8x128xf32>
    %9 = vector.extract_strided_slice %4 {offsets = [0, 0, 0], sizes = [2, 8, 128], strides = [1, 1, 1]} : vector<2x8x640xf32> to vector<2x8x128xf32>
    %10 = vector.broadcast %6 : vector<1x8x128xf32> to vector<2x8x128xf32>
    %11 = arith.mulf %9, %10 : vector<2x8x128xf32>
    %12 = vector.extract_strided_slice %4 {offsets = [0, 0, 128], sizes = [2, 8, 128], strides = [1, 1, 1]} : vector<2x8x640xf32> to vector<2x8x128xf32>
    %13 = vector.broadcast %8 : vector<1x8x128xf32> to vector<2x8x128xf32>
    %14 = arith.mulf %12, %13 : vector<2x8x128xf32>
    %15 = arith.addf %11, %14 : vector<2x8x128xf32>
    %16 = vector.extract_strided_slice %4 {offsets = [0, 0, 256], sizes = [2, 8, 128], strides = [1, 1, 1]} : vector<2x8x640xf32> to vector<2x8x128xf32>
    %17 = vector.broadcast %6 : vector<1x8x128xf32> to vector<2x8x128xf32>
    %18 = arith.mulf %16, %17 : vector<2x8x128xf32>
    %19 = vector.extract_strided_slice %4 {offsets = [0, 0, 384], sizes = [2, 8, 128], strides = [1, 1, 1]} : vector<2x8x640xf32> to vector<2x8x128xf32>
    %20 = vector.broadcast %8 : vector<1x8x128xf32> to vector<2x8x128xf32>
    %21 = arith.mulf %19, %20 : vector<2x8x128xf32>
    %22 = arith.addf %18, %21 : vector<2x8x128xf32>
    %23 = vector.extract_strided_slice %4 {offsets = [0, 0, 512], sizes = [2, 8, 128], strides = [1, 1, 1]} : vector<2x8x640xf32> to vector<2x8x128xf32>
    %24 = arith.truncf %15 : vector<2x8x128xf32> to vector<2x8x128xbf16>
    %25 = arith.truncf %22 : vector<2x8x128xf32> to vector<2x8x128xbf16>
    %26 = arith.truncf %23 : vector<2x8x128xf32> to vector<2x8x128xbf16>
    %27 = vector.extract_strided_slice %24 {offsets = [0, 0, 0], sizes = [2, 8, 32], strides = [1, 1, 1]} : vector<2x8x128xbf16> to vector<2x8x32xbf16>
    %28 = vector.extract_strided_slice %25 {offsets = [0, 0, 0], sizes = [2, 8, 32], strides = [1, 1, 1]} : vector<2x8x128xbf16> to vector<2x8x32xbf16>
    "tpu.trace_start"() <{level = 10 : i32, message = "bqd,bkd->bqk"}> : () -> ()
    %cst_7 = arith.constant dense<0.000000e+00> : vector<2x8x8xf32>
    %29 = tpu.matmul %27, %28, %cst_7 {dimension_numbers = #tpu.dot_dimension_numbers<[2], [2], [1], [1], [0, 0, 0, 1, 1, 1], [0], [0]>} : vector<2x8x32xbf16>, vector<2x8x32xbf16>, vector<2x8x8xf32> -> vector<2x8x8xf32>
    "tpu.trace_stop"() : () -> ()
    %30 = vector.extract_strided_slice %24 {offsets = [0, 0, 32], sizes = [2, 8, 32], strides = [1, 1, 1]} : vector<2x8x128xbf16> to vector<2x8x32xbf16>
    %31 = vector.extract_strided_slice %25 {offsets = [0, 0, 32], sizes = [2, 8, 32], strides = [1, 1, 1]} : vector<2x8x128xbf16> to vector<2x8x32xbf16>
    "tpu.trace_start"() <{level = 10 : i32, message = "bqd,bkd->bqk"}> : () -> ()
    %cst_8 = arith.constant dense<0.000000e+00> : vector<2x8x8xf32>
    %32 = tpu.matmul %30, %31, %cst_8 {dimension_numbers = #tpu.dot_dimension_numbers<[2], [2], [1], [1], [0, 0, 0, 1, 1, 1], [0], [0]>} : vector<2x8x32xbf16>, vector<2x8x32xbf16>, vector<2x8x8xf32> -> vector<2x8x8xf32>
    "tpu.trace_stop"() : () -> ()
    %33 = vector.extract_strided_slice %24 {offsets = [0, 0, 64], sizes = [2, 8, 32], strides = [1, 1, 1]} : vector<2x8x128xbf16> to vector<2x8x32xbf16>
    %34 = vector.extract_strided_slice %25 {offsets = [0, 0, 64], sizes = [2, 8, 32], strides = [1, 1, 1]} : vector<2x8x128xbf16> to vector<2x8x32xbf16>
    "tpu.trace_start"() <{level = 10 : i32, message = "bqd,bkd->bqk"}> : () -> ()
    %cst_9 = arith.constant dense<0.000000e+00> : vector<2x8x8xf32>
    %35 = tpu.matmul %33, %34, %cst_9 {dimension_numbers = #tpu.dot_dimension_numbers<[2], [2], [1], [1], [0, 0, 0, 1, 1, 1], [0], [0]>} : vector<2x8x32xbf16>, vector<2x8x32xbf16>, vector<2x8x8xf32> -> vector<2x8x8xf32>
    "tpu.trace_stop"() : () -> ()
    %36 = vector.extract_strided_slice %24 {offsets = [0, 0, 96], sizes = [2, 8, 32], strides = [1, 1, 1]} : vector<2x8x128xbf16> to vector<2x8x32xbf16>
    %37 = vector.extract_strided_slice %25 {offsets = [0, 0, 96], sizes = [2, 8, 32], strides = [1, 1, 1]} : vector<2x8x128xbf16> to vector<2x8x32xbf16>
    "tpu.trace_start"() <{level = 10 : i32, message = "bqd,bkd->bqk"}> : () -> ()
    %cst_10 = arith.constant dense<0.000000e+00> : vector<2x8x8xf32>
    %38 = tpu.matmul %36, %37, %cst_10 {dimension_numbers = #tpu.dot_dimension_numbers<[2], [2], [1], [1], [0, 0, 0, 1, 1, 1], [0], [0]>} : vector<2x8x32xbf16>, vector<2x8x32xbf16>, vector<2x8x8xf32> -> vector<2x8x8xf32>
    "tpu.trace_stop"() : () -> ()
    %39 = vector.shape_cast %29 : vector<2x8x8xf32> to vector<1x2x8x8xf32>
    %40 = vector.shape_cast %32 : vector<2x8x8xf32> to vector<1x2x8x8xf32>
    %41 = vector.shape_cast %35 : vector<2x8x8xf32> to vector<1x2x8x8xf32>
    %42 = vector.shape_cast %38 : vector<2x8x8xf32> to vector<1x2x8x8xf32>
    %43 = tpu.concatenate %39, %40, %41, %42 in 0 : vector<1x2x8x8xf32>, vector<1x2x8x8xf32>, vector<1x2x8x8xf32>, vector<1x2x8x8xf32> -> vector<4x2x8x8xf32>
    %44 = tpu.iota {dimensions = array<i32: 0>} : vector<8x8xi32>
    %45 = tpu.iota {dimensions = array<i32: 1>} : vector<8x8xi32>
    %46 = arith.cmpi sle, %45, %44 : vector<8x8xi32>
    %47 = vector.shape_cast %46 : vector<8x8xi1> to vector<1x1x8x8xi1>
    %cst_11 = arith.constant -1.000000e+30 : f32
    %48 = vector.shape_cast %47 : vector<1x1x8x8xi1> to vector<1x1x8x8xi1>
    %49 = vector.broadcast %48 : vector<1x1x8x8xi1> to vector<4x2x8x8xi1>
    %50 = vector.broadcast %cst_11 : f32 to vector<4x2x8x8xf32>
    %51 = arith.select %49, %43, %50 : vector<4x2x8x8xi1>, vector<4x2x8x8xf32>
    %cst_12 = arith.constant dense<0xFF800000> : vector<4x2x8xf32>
    %52 = vector.multi_reduction <maximumf>, %51, %cst_12 [3] : vector<4x2x8x8xf32> to vector<4x2x8xf32>
    %53 = vector.shape_cast %52 : vector<4x2x8xf32> to vector<4x2x8x1xf32>
    %54 = vector.broadcast %53 : vector<4x2x8x1xf32> to vector<4x2x8x8xf32>
    %55 = arith.subf %51, %54 : vector<4x2x8x8xf32>
    %56 = math.exp %55 : vector<4x2x8x8xf32>
    %cst_13 = arith.constant dense<0.000000e+00> : vector<4x2x8xf32>
    %57 = vector.multi_reduction <add>, %56, %cst_13 [3] : vector<4x2x8x8xf32> to vector<4x2x8xf32>
    %58 = vector.shape_cast %57 : vector<4x2x8xf32> to vector<4x2x8x1xf32>
    %59 = tpu.reciprocal %58 {approx = true} : vector<4x2x8x1xf32> -> vector<4x2x8x1xf32>
    %60 = vector.broadcast %59 : vector<4x2x8x1xf32> to vector<4x2x8x8xf32>
    %61 = arith.mulf %56, %60 : vector<4x2x8x8xf32>
    %62 = arith.truncf %61 : vector<4x2x8x8xf32> to vector<4x2x8x8xbf16>
    %63 = vector.extract_strided_slice %62 {offsets = [0, 0, 0, 0], sizes = [1, 2, 8, 8], strides = [1, 1, 1, 1]} : vector<4x2x8x8xbf16> to vector<1x2x8x8xbf16>
    %64 = vector.shape_cast %63 : vector<1x2x8x8xbf16> to vector<2x8x8xbf16>
    %65 = vector.extract_strided_slice %26 {offsets = [0, 0, 0], sizes = [2, 8, 32], strides = [1, 1, 1]} : vector<2x8x128xbf16> to vector<2x8x32xbf16>
    "tpu.trace_start"() <{level = 10 : i32, message = "bqk,bkd->bqd"}> : () -> ()
    %cst_14 = arith.constant dense<0.000000e+00> : vector<2x8x32xf32>
    %66 = tpu.matmul %64, %65, %cst_14 {dimension_numbers = #tpu.dot_dimension_numbers<[2], [1], [1], [2], [0, 0, 0, 1, 1, 2], [0], [0]>} : vector<2x8x8xbf16>, vector<2x8x32xbf16>, vector<2x8x32xf32> -> vector<2x8x32xf32>
    "tpu.trace_stop"() : () -> ()
    %67 = vector.extract_strided_slice %62 {offsets = [1, 0, 0, 0], sizes = [1, 2, 8, 8], strides = [1, 1, 1, 1]} : vector<4x2x8x8xbf16> to vector<1x2x8x8xbf16>
    %68 = vector.shape_cast %67 : vector<1x2x8x8xbf16> to vector<2x8x8xbf16>
    %69 = vector.extract_strided_slice %26 {offsets = [0, 0, 32], sizes = [2, 8, 32], strides = [1, 1, 1]} : vector<2x8x128xbf16> to vector<2x8x32xbf16>
    "tpu.trace_start"() <{level = 10 : i32, message = "bqk,bkd->bqd"}> : () -> ()
    %cst_15 = arith.constant dense<0.000000e+00> : vector<2x8x32xf32>
    %70 = tpu.matmul %68, %69, %cst_15 {dimension_numbers = #tpu.dot_dimension_numbers<[2], [1], [1], [2], [0, 0, 0, 1, 1, 2], [0], [0]>} : vector<2x8x8xbf16>, vector<2x8x32xbf16>, vector<2x8x32xf32> -> vector<2x8x32xf32>
    "tpu.trace_stop"() : () -> ()
    %71 = vector.extract_strided_slice %62 {offsets = [2, 0, 0, 0], sizes = [1, 2, 8, 8], strides = [1, 1, 1, 1]} : vector<4x2x8x8xbf16> to vector<1x2x8x8xbf16>
    %72 = vector.shape_cast %71 : vector<1x2x8x8xbf16> to vector<2x8x8xbf16>
    %73 = vector.extract_strided_slice %26 {offsets = [0, 0, 64], sizes = [2, 8, 32], strides = [1, 1, 1]} : vector<2x8x128xbf16> to vector<2x8x32xbf16>
    "tpu.trace_start"() <{level = 10 : i32, message = "bqk,bkd->bqd"}> : () -> ()
    %cst_16 = arith.constant dense<0.000000e+00> : vector<2x8x32xf32>
    %74 = tpu.matmul %72, %73, %cst_16 {dimension_numbers = #tpu.dot_dimension_numbers<[2], [1], [1], [2], [0, 0, 0, 1, 1, 2], [0], [0]>} : vector<2x8x8xbf16>, vector<2x8x32xbf16>, vector<2x8x32xf32> -> vector<2x8x32xf32>
    "tpu.trace_stop"() : () -> ()
    %75 = vector.extract_strided_slice %62 {offsets = [3, 0, 0, 0], sizes = [1, 2, 8, 8], strides = [1, 1, 1, 1]} : vector<4x2x8x8xbf16> to vector<1x2x8x8xbf16>
    %76 = vector.shape_cast %75 : vector<1x2x8x8xbf16> to vector<2x8x8xbf16>
    %77 = vector.extract_strided_slice %26 {offsets = [0, 0, 96], sizes = [2, 8, 32], strides = [1, 1, 1]} : vector<2x8x128xbf16> to vector<2x8x32xbf16>
    "tpu.trace_start"() <{level = 10 : i32, message = "bqk,bkd->bqd"}> : () -> ()
    %cst_17 = arith.constant dense<0.000000e+00> : vector<2x8x32xf32>
    %78 = tpu.matmul %76, %77, %cst_17 {dimension_numbers = #tpu.dot_dimension_numbers<[2], [1], [1], [2], [0, 0, 0, 1, 1, 2], [0], [0]>} : vector<2x8x8xbf16>, vector<2x8x32xbf16>, vector<2x8x32xf32> -> vector<2x8x32xf32>
    "tpu.trace_stop"() : () -> ()
    %79 = tpu.concatenate %66, %70, %74, %78 in 2 : vector<2x8x32xf32>, vector<2x8x32xf32>, vector<2x8x32xf32>, vector<2x8x32xf32> -> vector<2x8x128xf32>
    %80 = vector.shape_cast %79 : vector<2x8x128xf32> to vector<16x128xf32>
    %81 = arith.truncf %80 : vector<16x128xf32> to vector<16x128xbf16>
    %c0_18 = arith.constant 0 : index
    %c0_19 = arith.constant 0 : index
    %82 = vector.load %arg5[%c0_18, %c0_19] : memref<128x128xbf16, #tpu.memory_space<vmem>>, vector<128x128xbf16>
    %cst_20 = arith.constant dense<0.000000e+00> : vector<16x128xf32>
    %83 = tpu.matmul %81, %82, %cst_20 {dimension_numbers = #tpu.dot_dimension_numbers<[1], [0], [0], [1], [0, 0, 1, 1], [], []>} : vector<16x128xbf16>, vector<128x128xbf16>, vector<16x128xf32> -> vector<16x128xf32>
    %c0_21 = arith.constant 0 : index
    %c0_22 = arith.constant 0 : index
    %84 = vector.load %arg6[%c0_21, %c0_22] : memref<1x128xf32, #tpu.memory_space<vmem>>, vector<1x128xf32>
    %85 = vector.broadcast %84 : vector<1x128xf32> to vector<16x128xf32>
    %86 = arith.addf %83, %85 : vector<16x128xf32>
    %c0_23 = arith.constant 0 : index
    %c0_24 = arith.constant 0 : index
    %87 = vector.load %arg7[%c0_23, %c0_24] : memref<16x128xf32, #tpu.memory_space<vmem>>, vector<16x128xf32>
    tpu.vector_store %arg7[%c0_23, %c0_24], %86 {strides = array<i32>} : memref<16x128xf32, #tpu.memory_space<vmem>>, vector<16x128xf32>,
    return
  }
  func.func @transform_0(%arg0: i32) -> (i32, i32) {
    %c0_i32 = arith.constant 0 : i32
    %c0_i32_0 = arith.constant 0 : i32
    %c0_i32_1 = arith.constant 0 : i32
    return %c0_i32, %c0_i32_0 : i32, i32
  }
  func.func @transform_1(%arg0: i32) -> (i32, i32) {
    %c0_i32 = arith.constant 0 : i32
    %c0_i32_0 = arith.constant 0 : i32
    %c0_i32_1 = arith.constant 0 : i32
    return %c0_i32, %c0_i32_0 : i32, i32
  }
  func.func @transform_2(%arg0: i32) -> (i32, i32) {
    %c0_i32 = arith.constant 0 : i32
    %c0_i32_0 = arith.constant 0 : i32
    %c0_i32_1 = arith.constant 0 : i32
    return %c0_i32, %c0_i32_0 : i32, i32
  }
  func.func @transform_3(%arg0: i32) -> (i32, i32) {
    %c0_i32 = arith.constant 0 : i32
    %c0_i32_0 = arith.constant 0 : i32
    %c0_i32_1 = arith.constant 0 : i32
    return %c0_i32, %c0_i32_0 : i32, i32
  }
  func.func @transform_4(%arg0: i32) -> (i32, i32) {
    %c0_i32 = arith.constant 0 : i32
    %c0_i32_0 = arith.constant 0 : i32
    %c0_i32_1 = arith.constant 0 : i32
    return %c0_i32, %c0_i32_0 : i32, i32
  }
  func.func @transform_5(%arg0: i32) -> (i32, i32) {
    %c0_i32 = arith.constant 0 : i32
    %c0_i32_0 = arith.constant 0 : i32
    %c0_i32_1 = arith.constant 0 : i32
    return %c0_i32, %c0_i32_0 : i32, i32
  }
  func.func @transform_6(%arg0: i32) -> (i32, i32) {
    %c0_i32 = arith.constant 0 : i32
    %c0_i32_0 = arith.constant 0 : i32
    %c0_i32_1 = arith.constant 0 : i32
    return %c0_i32, %c0_i32_0 : i32, i32
  }
}

</mosaic_0001>

<llo_original>
// kernel: tpu_custom_call.1
$region0: #{tpu_custom_call.1}
  #allocation0 [shape = 'u32[]', space=smem, size = 0x4, offset = 0x4, fixed_abs, tag = 'smem constant byte address 0x4 - core index']
  #allocation1 [shape = 'u32[72,128]{1,0:T(1,128)}', space=vmem, size = 0x9000, scoped, tag = 'internal scratch']
  %s0 = inlined_call_operand.hbm [shape: f32[16,32], index: 0, kind: input, shape index: {}]
  %s1 = inlined_call_operand.hbm [shape: bf16[32,640], index: 1, kind: input, shape index: {}]
  %s2 = inlined_call_operand.hbm [shape: f32[8,128], index: 2, kind: input, shape index: {}]
  %s3 = inlined_call_operand.hbm [shape: f32[8,128], index: 3, kind: input, shape index: {}]
  %s4 = inlined_call_operand.hbm [shape: bf16[128,128], index: 4, kind: input, shape index: {}]
  %s5 = inlined_call_operand.vmem [shape: f32[1,128], index: 5, kind: input, shape index: {}]
  %s6 = inlined_call_operand.hbm [shape: f32[16,128], index: 6, kind: output, shape index: {}]
  %s7 = sld [smem:[#allocation0]]
  $region54: #{tpu_custom_call.1} parent=0
    _
  %s9 = ssub.s32 1, %s7
  %s10 = scalar_select 0, %s9, %s7
  $region1: #{tpu_custom_call.1} parent=0
    #allocation2 [shape = 'u8[8192]{0}', space=vmem, size = 0x2000, scoped, tag = 'input window, operand 0, single buffered']
    #allocation3 [shape = 's32[1]{0}', space=sflag, size = 0x4, scoped, tag = 'scoped memory for tpu_custom_call.1']
    #allocation4 [shape = 's32[1]{0}', space=sflag, size = 0x4, scoped, tag = 'scoped memory for tpu_custom_call.1']
    #allocation5 [shape = 'u8[40960]{0}', space=vmem, size = 0xa000, scoped, tag = 'input window, operand 1, single buffered']
    #allocation6 [shape = 's32[1]{0}', space=sflag, size = 0x4, scoped, tag = 'scoped memory for tpu_custom_call.1']
    #allocation7 [shape = 'u8[4096]{0}', space=vmem, size = 0x1000, scoped, tag = 'input window, operand 2, single buffered']
    #allocation8 [shape = 'u8[4096]{0}', space=vmem, size = 0x1000, scoped, tag = 'input window, operand 3, single buffered']
    #allocation9 [shape = 's32[1]{0}', space=sflag, size = 0x4, scoped, tag = 'scoped memory for tpu_custom_call.1']
    #allocation10 [shape = 'u8[32768]{0}', space=vmem, size = 0x8000, scoped, tag = 'input window, operand 4, single buffered']
    #allocation11 [shape = 'u8[8192]{0}', space=vmem, size = 0x2000, scoped, tag = 'output window, operand 0, single buffered']
    %11 = vsyncpa [#allocation3], 0
    %12 = vsyncpa [#allocation6], 0
    %13 = vsyncpa [#allocation9], 0
    %14 = vsyncpa [#allocation4], 0
    // Predicated region
    $region2: #{tpu_custom_call.1} parent=1 // pred_check
      _
    $region3: #{tpu_custom_call.1} parent=1 // pred_check_branch
      %16 = sbr.rel (0) target = $region5
    $region4: #{tpu_custom_call.1} parent=1 // pred_region
      %18 = vsyncadd [#allocation3], 0
      %s19 = sshll.u32 %s0, 4
      %s20 = int_to_ptr.hbm [resolvable:$true] %s19
      %s21 = sshll.u32 [#allocation2], 4
      %s22 = int_to_ptr.vmem [resolvable:$true] %s21
      %27 = dma.hbm_to_vmem [thread:$0]  %s20, 256, %s22, [#allocation3], 128, 128, 8
    $region5: #{tpu_custom_call.1} parent=1 // pred_fallthru
      _
    // Predicated region
    $region6: #{tpu_custom_call.1} parent=1 // pred_check
      _
    $region7: #{tpu_custom_call.1} parent=1 // pred_check_branch
      %29 = sbr.rel (0) target = $region9
    $region8: #{tpu_custom_call.1} parent=1 // pred_region
      %31 = vsyncadd [#allocation6], 0
      %s32 = sshll.u32 %s1, 4
      %s33 = int_to_ptr.hbm [resolvable:$true] %s32
      %s34 = sshll.u32 [#allocation5], 4
      %s35 = int_to_ptr.vmem [resolvable:$true] %s34
      %40 = dma.hbm_to_vmem [thread:$0]  %s33, 1280, %s35, [#allocation6], 320, 320, 20
    $region9: #{tpu_custom_call.1} parent=1 // pred_fallthru
      _
    // Predicated region
    $region10: #{tpu_custom_call.1} parent=1 // pred_check
      _
    $region11: #{tpu_custom_call.1} parent=1 // pred_check_branch
      %42 = sbr.rel (0) target = $region13
    $region12: #{tpu_custom_call.1} parent=1 // pred_region
      %44 = vsyncadd [#allocation6], 0
      %s46 = sshll.u32 %s2, 4
      %s47 = int_to_ptr.hbm [resolvable:$true] %s46
      %s48 = sshll.u32 [#allocation7], 4
      %s49 = int_to_ptr.vmem [resolvable:$true] %s48
      %51 = dma.hbm_to_vmem [thread:$0]  %s47, 128, %s49, [#allocation6]
    $region13: #{tpu_custom_call.1} parent=1 // pred_fallthru
      _
    // Predicated region
    $region14: #{tpu_custom_call.1} parent=1 // pred_check
      _
    $region15: #{tpu_custom_call.1} parent=1 // pred_check_branch
      %53 = sbr.rel (0) target = $region17
    $region16: #{tpu_custom_call.1} parent=1 // pred_region
      %55 = vsyncadd [#allocation9], 0
      %s57 = sshll.u32 %s3, 4
      %s58 = int_to_ptr.hbm [resolvable:$true] %s57
      %s59 = sshll.u32 [#allocation8], 4
      %s60 = int_to_ptr.vmem [resolvable:$true] %s59
      %62 = dma.hbm_to_vmem [thread:$0]  %s58, 128, %s60, [#allocation9]
    $region17: #{tpu_custom_call.1} parent=1 // pred_fallthru
      _
    // Predicated region
    $region18: #{tpu_custom_call.1} parent=1 // pred_check
      _
    $region19: #{tpu_custom_call.1} parent=1 // pred_check_branch
      %64 = sbr.rel (0) target = $region21
    $region20: #{tpu_custom_call.1} parent=1 // pred_region
      %66 = vsyncadd [#allocation9], 0
      %s67 = sshll.u32 %s4, 4
      %s68 = int_to_ptr.hbm [resolvable:$true] %s67
      %s69 = sshll.u32 [#allocation10], 4
      %s70 = int_to_ptr.vmem [resolvable:$true] %s69
      %75 = dma.hbm_to_vmem [thread:$0]  %s68, 1024, %s70, [#allocation9], 64, 64, 4
    $region21: #{tpu_custom_call.1} parent=1 // pred_fallthru
      _
    // Predicated region
    $region22: #{tpu_custom_call.1} parent=1 // pred_check
      _
    $region23: #{tpu_custom_call.1} parent=1 // pred_check_branch
      %77 = sbr.rel (0) target = $region25
    $region24: #{tpu_custom_call.1} parent=1 // pred_region
      _
    $region25: #{tpu_custom_call.1} parent=1 // pred_fallthru
      _
    // Predicated region
    $region26: #{tpu_custom_call.1} parent=1 // pred_check
      _
    $region27: #{tpu_custom_call.1} parent=1 // pred_check_branch
      %79 = sbr.rel (0) target = $region29
    $region28: #{tpu_custom_call.1} parent=1 // pred_region
      %81 = dma.done [#allocation3], 256
    $region29: #{tpu_custom_call.1} parent=1 // pred_fallthru
      _
    // Predicated region
    $region30: #{tpu_custom_call.1} parent=1 // pred_check
      _
    $region31: #{tpu_custom_call.1} parent=1 // pred_check_branch
      %83 = sbr.rel (0) target = $region33
    $region32: #{tpu_custom_call.1} parent=1 // pred_region
      %85 = dma.done [#allocation6], 1280
    $region33: #{tpu_custom_call.1} parent=1 // pred_fallthru
      _
    // Predicated region
    $region34: #{tpu_custom_call.1} parent=1 // pred_check
      _
    $region35: #{tpu_custom_call.1} parent=1 // pred_check_branch
      %87 = sbr.rel (0) target = $region37
    $region36: #{tpu_custom_call.1} parent=1 // pred_region
      %89 = dma.done [#allocation6], 128
    $region37: #{tpu_custom_call.1} parent=1 // pred_fallthru
      _
    // Predicated region
    $region38: #{tpu_custom_call.1} parent=1 // pred_check
      _
    $region39: #{tpu_custom_call.1} parent=1 // pred_check_branch
      %91 = sbr.rel (0) target = $region41
    $region40: #{tpu_custom_call.1} parent=1 // pred_region
      %93 = dma.done [#allocation9], 128
    $region41: #{tpu_custom_call.1} parent=1 // pred_fallthru
      _
    // Predicated region
    $region42: #{tpu_custom_call.1} parent=1 // pred_check
      _
    $region43: #{tpu_custom_call.1} parent=1 // pred_check_branch
      %95 = sbr.rel (0) target = $region45
    $region44: #{tpu_custom_call.1} parent=1 // pred_region
      %97 = dma.done [#allocation9], 1024
    $region45: #{tpu_custom_call.1} parent=1 // pred_fallthru
      _
    %v99 = vld [vmem:[#allocation2] sm:$0xff]
    %v100 = vld [vmem:[#allocation2 + $0x8] sm:$0xff]
    %v101 = vpack.c.bf16 %v100, %v99
    %v102 = vld [vmem:[#allocation5] sm:$0xff]
    %v103 = vld [vmem:[#allocation5 + $0x8] sm:$0xff]
    %v104 = vld [vmem:[#allocation5 + $0x10] sm:$0xf]
    %v105 = vld [vmem:[#allocation5 + $0x14] sm:$0xff]
    %v106 = vld [vmem:[#allocation5 + $0x1c] sm:$0xff]
    %v107 = vld [vmem:[#allocation5 + $0x24] sm:$0xf]
    %v108 = vld [vmem:[#allocation5 + $0x28] sm:$0xff]
    %v109 = vld [vmem:[#allocation5 + $0x30] sm:$0xff]
    %v110 = vld [vmem:[#allocation5 + $0x38] sm:$0xf]
    %v111 = vld [vmem:[#allocation5 + $0x3c] sm:$0xff]
    %v112 = vld [vmem:[#allocation5 + $0x44] sm:$0xff]
    %v113 = vld [vmem:[#allocation5 + $0x4c] sm:$0xf]
    %v126 = vunpack.c.l.b16 %v102
    %v127 = vunpack.c.h.b16 %v102
    %v128 = vunpack.c.l.b16 %v103
    %v129 = vunpack.c.h.b16 %v103
    %v130 = vunpack.c.l.b16 %v104
    %v131 = vunpack.c.l.b16 %v105
    %v132 = vunpack.c.h.b16 %v105
    %v133 = vunpack.c.l.b16 %v106
    %v134 = vunpack.c.h.b16 %v106
    %v135 = vunpack.c.l.b16 %v107
    %v136 = vunpack.c.l.b16 %v108
    %v137 = vunpack.c.h.b16 %v108
    %v138 = vunpack.c.l.b16 %v109
    %v139 = vunpack.c.h.b16 %v109
    %v140 = vunpack.c.l.b16 %v110
    %v141 = vunpack.c.l.b16 %v111
    %v142 = vunpack.c.h.b16 %v111
    %v143 = vunpack.c.l.b16 %v112
    %v144 = vunpack.c.h.b16 %v112
    %v145 = vunpack.c.l.b16 %v113
    %v146 = vpack.c.b16 %v131, %v126
    %v147 = vpack.c.b16 %v132, %v127
    %v148 = vpack.c.b16 %v133, %v128
    %v149 = vpack.c.b16 %v134, %v129
    %v150 = vpack.c.b16 %v135, %v130
    %v151 = vpack.c.b16 %v141, %v136
    %v152 = vpack.c.b16 %v142, %v137
    %v153 = vpack.c.b16 %v143, %v138
    %v154 = vpack.c.b16 %v144, %v139
    %v155 = vpack.c.b16 %v145, %v140
    %vm166 = vcmask 261120
    %v168 = vsel %vm166, %v101, 0
    %170 = vmatpush.bf16.msra.mxu0 0
    %171 = vmatpush.bf16.msra.mxu0 0
    %172 = vmatpush.bf16.msra.mxu0 0
    %173 = vmatpush.bf16.msra.mxu0 0
    %174 = vmatpush.bf16.msra.mxu0 0
    %175 = vmatpush.bf16.msra.mxu0 0
    %176 = vmatpush.bf16.msra.mxu0 %v151
    %177 = vmatpush.bf16.msra.mxu0 %v146
    %178 = vmatmul.bf16.gmra.mxu0 %v168
    %v179 = vpop.f32.mrf.mxu0
    %v180 = vadd.f32 0.0, %v179
    %v181 = vpop.f32.mrf.mxu0
    %v182 = vadd.f32 0.0, %v181
    %183 = vdwg.mxu0
    %184 = vmatpush.bf16.msra.mxu0 0
    %185 = vmatpush.bf16.msra.mxu0 0
    %186 = vmatpush.bf16.msra.mxu0 0
    %187 = vmatpush.bf16.msra.mxu0 0
    %188 = vmatpush.bf16.msra.mxu0 0
    %189 = vmatpush.bf16.msra.mxu0 0
    %190 = vmatpush.bf16.msra.mxu0 %v152
    %191 = vmatpush.bf16.msra.mxu0 %v147
    %192 = vmatmul.bf16.gmra.mxu0 %v168
    %v193 = vpop.f32.mrf.mxu0
    %v194 = vadd.f32 0.0, %v193
    %v195 = vpop.f32.mrf.mxu0
    %v196 = vadd.f32 0.0, %v195
    %197 = vdwg.mxu0
    %198 = vmatpush.bf16.msra.mxu0 0
    %199 = vmatpush.bf16.msra.mxu0 0
    %200 = vmatpush.bf16.msra.mxu0 0
    %201 = vmatpush.bf16.msra.mxu0 0
    %202 = vmatpush.bf16.msra.mxu0 0
    %203 = vmatpush.bf16.msra.mxu0 0
    %204 = vmatpush.bf16.msra.mxu0 %v153
    %205 = vmatpush.bf16.msra.mxu0 %v148
    %206 = vmatmul.bf16.gmra.mxu0 %v168
    %v207 = vpop.f32.mrf.mxu0
    %v208 = vadd.f32 0.0, %v207
    %v209 = vpop.f32.mrf.mxu0
    %v210 = vadd.f32 0.0, %v209
    %211 = vdwg.mxu0
    %212 = vmatpush.bf16.msra.mxu0 0
    %213 = vmatpush.bf16.msra.mxu0 0
    %214 = vmatpush.bf16.msra.mxu0 0
    %215 = vmatpush.bf16.msra.mxu0 0
    %216 = vmatpush.bf16.msra.mxu0 0
    %217 = vmatpush.bf16.msra.mxu0 0
    %218 = vmatpush.bf16.msra.mxu0 %v154
    %219 = vmatpush.bf16.msra.mxu0 %v149
    %220 = vmatmul.bf16.gmra.mxu0 %v168
    %v221 = vpop.f32.mrf.mxu0
    %v222 = vadd.f32 0.0, %v221
    %v223 = vpop.f32.mrf.mxu0
    %v224 = vadd.f32 0.0, %v223
    %225 = vdwg.mxu0
    %226 = vmatpush.bf16.msra.mxu0 0
    %227 = vmatpush.bf16.msra.mxu0 0
    %228 = vmatpush.bf16.msra.mxu0 0
    %229 = vmatpush.bf16.msra.mxu0 0
    %230 = vmatpush.bf16.msra.mxu0 0
    %231 = vmatpush.bf16.msra.mxu0 0
    %232 = vmatpush.bf16.msra.mxu0 %v155
    %233 = vmatpush.bf16.msra.mxu0 %v150
    %234 = vmatmul.bf16.gmra.mxu0 %v168
    %v235 = vpop.f32.mrf.mxu0
    %v236 = vadd.f32 0.0, %v235
    %v237 = vpop.f32.mrf.mxu0
    %v238 = vadd.f32 0.0, %v237
    %239 = vdwg.mxu0
    %v240 = vld [vmem:[#allocation7] sm:$0xff]
    %v241 = vld [vmem:[#allocation8] sm:$0xff]
    %v242 = vmul.f32 %v180, %v240
    %v243 = vmul.f32 %v182, %v240
    %v244 = vmul.f32 %v194, %v241
    %v245 = vmul.f32 %v196, %v241
    %v246 = vadd.f32 %v242, %v244
    %v247 = vadd.f32 %v243, %v245
    %v248 = vmul.f32 %v208, %v240
    %v249 = vmul.f32 %v210, %v240
    %v250 = vmul.f32 %v222, %v241
    %v251 = vmul.f32 %v224, %v241
    %v252 = vadd.f32 %v248, %v250
    %v253 = vadd.f32 %v249, %v251
    %v254 = vpack.c.bf16 %v246, %v246
    %v255 = vpack.c.bf16 %v247, %v247
    %v256 = vpack.c.bf16 %v252, %v252
    %v257 = vpack.c.bf16 %v253, %v253
    %v258 = vpack.c.bf16 %v236, %v236
    %v259 = vpack.c.bf16 %v238, %v238
    %v261 = vsel %vm166, %v254, 0
    %v264 = vsel %vm166, %v256, 0
    %266 = vmatpush.bf16.xpose.msra.mxu0 0
    %267 = vmatpush.bf16.xpose.msra.mxu0 0
    %268 = vmatpush.bf16.xpose.msra.mxu0 0
    %269 = vmatpush.bf16.xpose.msra.mxu0 0
    %270 = vmatpush.bf16.xpose.msra.mxu0 0
    %271 = vmatpush.bf16.xpose.msra.mxu0 0
    %272 = vmatpush.bf16.xpose.msra.mxu0 0
    %273 = vmatpush.bf16.xpose.msra.mxu0 %v264
    %274 = vmatmul.bf16.gmra.mxu0 %v261
    %v275 = vpop.f32.mrf.mxu0
    %v276 = vadd.f32 0.0, %v275
    %v277 = vpop.f32.mrf.mxu0
    %278 = vdwg.mxu0
    %v280 = vsel %vm166, %v255, 0
    %v283 = vsel %vm166, %v257, 0
    %285 = vmatpush.bf16.xpose.msra.mxu0 0
    %286 = vmatpush.bf16.xpose.msra.mxu0 0
    %287 = vmatpush.bf16.xpose.msra.mxu0 0
    %288 = vmatpush.bf16.xpose.msra.mxu0 0
    %289 = vmatpush.bf16.xpose.msra.mxu0 0
    %290 = vmatpush.bf16.xpose.msra.mxu0 0
    %291 = vmatpush.bf16.xpose.msra.mxu0 0
    %292 = vmatpush.bf16.xpose.msra.mxu0 %v283
    %293 = vmatmul.bf16.gmra.mxu0 %v280
    %v294 = vpop.f32.mrf.mxu0
    %v295 = vadd.f32 0.0, %v294
    %v296 = vpop.f32.mrf.mxu0
    %297 = vdwg.mxu0
    %v299 = vunpack.c.l.b16 %v254
    %v300 = vpack.c.b16 %v299, %v299
    %301 = vrot.lane.b32.xlu0 %v300, 96
    %v302 = vpop.permute.xlu0 %301
    %v304 = vunpack.c.l.b16 %v256
    %v305 = vpack.c.b16 %v304, %v304
    %306 = vrot.lane.b32.xlu0 %v305, 96
    %v307 = vpop.permute.xlu0 %306
    %v309 = vsel %vm166, %v302, 0
    %v312 = vsel %vm166, %v307, 0
    %314 = vmatpush.bf16.xpose.msra.mxu0 0
    %315 = vmatpush.bf16.xpose.msra.mxu0 0
    %316 = vmatpush.bf16.xpose.msra.mxu0 0
    %317 = vmatpush.bf16.xpose.msra.mxu0 0
    %318 = vmatpush.bf16.xpose.msra.mxu0 0
    %319 = vmatpush.bf16.xpose.msra.mxu0 0
    %320 = vmatpush.bf16.xpose.msra.mxu0 0
    %321 = vmatpush.bf16.xpose.msra.mxu0 %v312
    %322 = vmatmul.bf16.gmra.mxu0 %v309
    %v323 = vpop.f32.mrf.mxu0
    %v324 = vadd.f32 0.0, %v323
    %v325 = vpop.f32.mrf.mxu0
    %326 = vdwg.mxu0
    %v328 = vunpack.c.l.b16 %v255
    %v329 = vpack.c.b16 %v328, %v328
    %330 = vrot.lane.b32.xlu0 %v329, 96
    %v331 = vpop.permute.xlu0 %330
    %v333 = vunpack.c.l.b16 %v257
    %v334 = vpack.c.b16 %v333, %v333
    %335 = vrot.lane.b32.xlu0 %v334, 96
    %v336 = vpop.permute.xlu0 %335
    %v338 = vsel %vm166, %v331, 0
    %v341 = vsel %vm166, %v336, 0
    %343 = vmatpush.bf16.xpose.msra.mxu0 0
    %344 = vmatpush.bf16.xpose.msra.mxu0 0
    %345 = vmatpush.bf16.xpose.msra.mxu0 0
    %346 = vmatpush.bf16.xpose.msra.mxu0 0
    %347 = vmatpush.bf16.xpose.msra.mxu0 0
    %348 = vmatpush.bf16.xpose.msra.mxu0 0
    %349 = vmatpush.bf16.xpose.msra.mxu0 0
    %350 = vmatpush.bf16.xpose.msra.mxu0 %v341
    %351 = vmatmul.bf16.gmra.mxu0 %v338
    %v352 = vpop.f32.mrf.mxu0
    %v353 = vadd.f32 0.0, %v352
    %v354 = vpop.f32.mrf.mxu0
    %355 = vdwg.mxu0
    %356 = vrot.lane.b32.xlu0 %v300, 64
    %v357 = vpop.permute.xlu0 %356
    %358 = vrot.lane.b32.xlu0 %v305, 64
    %v359 = vpop.permute.xlu0 %358
    %v361 = vsel %vm166, %v357, 0
    %v364 = vsel %vm166, %v359, 0
    %366 = vmatpush.bf16.xpose.msra.mxu0 0
    %367 = vmatpush.bf16.xpose.msra.mxu0 0
    %368 = vmatpush.bf16.xpose.msra.mxu0 0
    %369 = vmatpush.bf16.xpose.msra.mxu0 0
    %370 = vmatpush.bf16.xpose.msra.mxu0 0
    %371 = vmatpush.bf16.xpose.msra.mxu0 0
    %372 = vmatpush.bf16.xpose.msra.mxu0 0
    %373 = vmatpush.bf16.xpose.msra.mxu0 %v364
    %374 = vmatmul.bf16.gmra.mxu0 %v361
    %v375 = vpop.f32.mrf.mxu0
    %v376 = vadd.f32 0.0, %v375
    %v377 = vpop.f32.mrf.mxu0
    %378 = vdwg.mxu0
    %379 = vrot.lane.b32.xlu0 %v329, 64
    %v380 = vpop.permute.xlu0 %379
    %381 = vrot.lane.b32.xlu0 %v334, 64
    %v382 = vpop.permute.xlu0 %381
    %v384 = vsel %vm166, %v380, 0
    %v387 = vsel %vm166, %v382, 0
    %389 = vmatpush.bf16.xpose.msra.mxu0 0
    %390 = vmatpush.bf16.xpose.msra.mxu0 0
    %391 = vmatpush.bf16.xpose.msra.mxu0 0
    %392 = vmatpush.bf16.xpose.msra.mxu0 0
    %393 = vmatpush.bf16.xpose.msra.mxu0 0
    %394 = vmatpush.bf16.xpose.msra.mxu0 0
    %395 = vmatpush.bf16.xpose.msra.mxu0 0
    %396 = vmatpush.bf16.xpose.msra.mxu0 %v387
    %397 = vmatmul.bf16.gmra.mxu0 %v384
    %v398 = vpop.f32.mrf.mxu0
    %v399 = vadd.f32 0.0, %v398
    %v400 = vpop.f32.mrf.mxu0
    %401 = vdwg.mxu0
    %402 = vrot.lane.b32.xlu0 %v300, 32
    %v403 = vpop.permute.xlu0 %402
    %404 = vrot.lane.b32.xlu0 %v305, 32
    %v405 = vpop.permute.xlu0 %404
    %v407 = vsel %vm166, %v403, 0
    %v410 = vsel %vm166, %v405, 0
    %412 = vmatpush.bf16.xpose.msra.mxu0 0
    %413 = vmatpush.bf16.xpose.msra.mxu0 0
    %414 = vmatpush.bf16.xpose.msra.mxu0 0
    %415 = vmatpush.bf16.xpose.msra.mxu0 0
    %416 = vmatpush.bf16.xpose.msra.mxu0 0
    %417 = vmatpush.bf16.xpose.msra.mxu0 0
    %418 = vmatpush.bf16.xpose.msra.mxu0 0
    %419 = vmatpush.bf16.xpose.msra.mxu0 %v410
    %420 = vmatmul.bf16.gmra.mxu0 %v407
    %v421 = vpop.f32.mrf.mxu0
    %v422 = vadd.f32 0.0, %v421
    %v423 = vpop.f32.mrf.mxu0
    %424 = vdwg.mxu0
    %425 = vrot.lane.b32.xlu0 %v329, 32
    %v426 = vpop.permute.xlu0 %425
    %427 = vrot.lane.b32.xlu0 %v334, 32
    %v428 = vpop.permute.xlu0 %427
    %v430 = vsel %vm166, %v426, 0
    %v433 = vsel %vm166, %v428, 0
    %435 = vmatpush.bf16.xpose.msra.mxu0 0
    %436 = vmatpush.bf16.xpose.msra.mxu0 0
    %437 = vmatpush.bf16.xpose.msra.mxu0 0
    %438 = vmatpush.bf16.xpose.msra.mxu0 0
    %439 = vmatpush.bf16.xpose.msra.mxu0 0
    %440 = vmatpush.bf16.xpose.msra.mxu0 0
    %441 = vmatpush.bf16.xpose.msra.mxu0 0
    %442 = vmatpush.bf16.xpose.msra.mxu0 %v433
    %443 = vmatmul.bf16.gmra.mxu0 %v430
    %v444 = vpop.f32.mrf.mxu0
    %v445 = vadd.f32 0.0, %v444
    %v446 = vpop.f32.mrf.mxu0
    %447 = vdwg.mxu0
    %v448 = vlaneseq
    %v449 = vshrl.u32 %v448, 7
    %v450 = vlaneseq
    %v451 = vand.u32 %v450, 127
    %vm452 = vcmp.le.s32.totalorder %v451, %v449
    %v453 = vsel %vm452, 1, 0
    %vm454 = vcmp.eq.s32.totalorder %v453, 1
    %v455 = vsel %vm454, %v276, -1e+30
    %v456 = vsel %vm454, %v295, -1e+30
    %v457 = vsel %vm454, %v324, -1e+30
    %v458 = vsel %vm454, %v353, -1e+30
    %v459 = vsel %vm454, %v376, -1e+30
    %v460 = vsel %vm454, %v399, -1e+30
    %v461 = vsel %vm454, %v422, -1e+30
    %v462 = vsel %vm454, %v445, -1e+30
    %vm463 = vcmask 64512
    %v464 = vsel %vm463, %v455, -inf
    %465 = vmax.xlane.f32.xlu0 %v464
    %v466 = vpop.xlane.xlu0 %465
    %v467 = vsel %vm463, %v456, -inf
    %468 = vmax.xlane.f32.xlu0 %v467
    %v469 = vpop.xlane.xlu0 %468
    %v470 = vsel %vm463, %v457, -inf
    %471 = vmax.xlane.f32.xlu0 %v470
    %v472 = vpop.xlane.xlu0 %471
    %v473 = vsel %vm463, %v458, -inf
    %474 = vmax.xlane.f32.xlu0 %v473
    %v475 = vpop.xlane.xlu0 %474
    %v476 = vsel %vm463, %v459, -inf
    %477 = vmax.xlane.f32.xlu0 %v476
    %v478 = vpop.xlane.xlu0 %477
    %v479 = vsel %vm463, %v460, -inf
    %480 = vmax.xlane.f32.xlu0 %v479
    %v481 = vpop.xlane.xlu0 %480
    %v482 = vsel %vm463, %v461, -inf
    %483 = vmax.xlane.f32.xlu0 %v482
    %v484 = vpop.xlane.xlu0 %483
    %v485 = vsel %vm463, %v462, -inf
    %486 = vmax.xlane.f32.xlu0 %v485
    %v487 = vpop.xlane.xlu0 %486
    %v488 = vsub.f32 %v455, %v466
    %v489 = vsub.f32 %v456, %v469
    %v490 = vsub.f32 %v457, %v472
    %v491 = vsub.f32 %v458, %v475
    %v492 = vsub.f32 %v459, %v478
    %v493 = vsub.f32 %v460, %v481
    %v494 = vsub.f32 %v461, %v484
    %v495 = vsub.f32 %v462, %v487
    %v496 = vmul.f32 %v488, 1.442695
    %v497 = vpow.pop %v496
    %v498 = vmul.f32 %v489, 1.442695
    %v499 = vpow.pop %v498
    %v500 = vmul.f32 %v490, 1.442695
    %v501 = vpow.pop %v500
    %v502 = vmul.f32 %v491, 1.442695
    %v503 = vpow.pop %v502
    %v504 = vmul.f32 %v492, 1.442695
    %v505 = vpow.pop %v504
    %v506 = vmul.f32 %v493, 1.442695
    %v507 = vpow.pop %v506
    %v508 = vmul.f32 %v494, 1.442695
    %v509 = vpow.pop %v508
    %v510 = vmul.f32 %v495, 1.442695
    %v511 = vpow.pop %v510
    %v512 = vsel %vm463, %v497, 0.0
    %513 = vadd.xlane.f32.xlu0 %v512
    %v514 = vpop.xlane.xlu0 %513
    %v515 = vsel %vm463, %v499, 0.0
    %516 = vadd.xlane.f32.xlu0 %v515
    %v517 = vpop.xlane.xlu0 %516
    %v518 = vsel %vm463, %v501, 0.0
    %519 = vadd.xlane.f32.xlu0 %v518
    %v520 = vpop.xlane.xlu0 %519
    %v521 = vsel %vm463, %v503, 0.0
    %522 = vadd.xlane.f32.xlu0 %v521
    %v523 = vpop.xlane.xlu0 %522
    %v524 = vsel %vm463, %v505, 0.0
    %525 = vadd.xlane.f32.xlu0 %v524
    %v526 = vpop.xlane.xlu0 %525
    %v527 = vsel %vm463, %v507, 0.0
    %528 = vadd.xlane.f32.xlu0 %v527
    %v529 = vpop.xlane.xlu0 %528
    %v530 = vsel %vm463, %v509, 0.0
    %531 = vadd.xlane.f32.xlu0 %v530
    %v532 = vpop.xlane.xlu0 %531
    %v533 = vsel %vm463, %v511, 0.0
    %534 = vadd.xlane.f32.xlu0 %v533
    %v535 = vpop.xlane.xlu0 %534
    %v536 = vrcp.pop %v514
    %v537 = vrcp.pop %v517
    %v538 = vrcp.pop %v520
    %v539 = vrcp.pop %v523
    %v540 = vrcp.pop %v526
    %v541 = vrcp.pop %v529
    %v542 = vrcp.pop %v532
    %v543 = vrcp.pop %v535
    %v544 = vmul.f32 %v497, %v536
    %v545 = vmul.f32 %v499, %v537
    %v546 = vmul.f32 %v501, %v538
    %v547 = vmul.f32 %v503, %v539
    %v548 = vmul.f32 %v505, %v540
    %v549 = vmul.f32 %v507, %v541
    %v550 = vmul.f32 %v509, %v542
    %v551 = vmul.f32 %v511, %v543
    %v552 = vpack.c.bf16 %v544, %v544
    %v553 = vpack.c.bf16 %v545, %v545
    %v554 = vpack.c.bf16 %v546, %v546
    %v555 = vpack.c.bf16 %v547, %v547
    %v556 = vpack.c.bf16 %v548, %v548
    %v557 = vpack.c.bf16 %v549, %v549
    %v558 = vpack.c.bf16 %v550, %v550
    %v559 = vpack.c.bf16 %v551, %v551
    %v561 = vsel %vm463, %v552, 0
    %vm563 = vcmask 1043456
    %v565 = vsel %vm563, %v258, 0
    %567 = vmatpush.bf16.msra.mxu0 0
    %568 = vmatpush.bf16.msra.mxu0 0
    %569 = vmatpush.bf16.msra.mxu0 0
    %570 = vmatpush.bf16.msra.mxu0 0
    %571 = vmatpush.bf16.msra.mxu0 0
    %572 = vmatpush.bf16.msra.mxu0 0
    %573 = vmatpush.bf16.msra.mxu0 0
    %574 = vmatpush.bf16.msra.mxu0 %v565
    %575 = vmatmul.bf16.gmra.mxu0 %v561
    %v576 = vpop.f32.mrf.mxu0
    %v577 = vadd.f32 0.0, %v576
    %v578 = vpop.f32.mrf.mxu0
    %579 = vdwg.mxu0
    %v581 = vsel %vm463, %v553, 0
    %v584 = vsel %vm563, %v259, 0
    %586 = vmatpush.bf16.msra.mxu0 0
    %587 = vmatpush.bf16.msra.mxu0 0
    %588 = vmatpush.bf16.msra.mxu0 0
    %589 = vmatpush.bf16.msra.mxu0 0
    %590 = vmatpush.bf16.msra.mxu0 0
    %591 = vmatpush.bf16.msra.mxu0 0
    %592 = vmatpush.bf16.msra.mxu0 0
    %593 = vmatpush.bf16.msra.mxu0 %v584
    %594 = vmatmul.bf16.gmra.mxu0 %v581
    %v595 = vpop.f32.mrf.mxu0
    %v596 = vadd.f32 0.0, %v595
    %v597 = vpop.f32.mrf.mxu0
    %598 = vdwg.mxu0
    %v600 = vunpack.c.l.b16 %v258
    %v601 = vpack.c.b16 %v600, %v600
    %602 = vrot.lane.b32.xlu0 %v601, 96
    %v603 = vpop.permute.xlu0 %602
    %v605 = vsel %vm463, %v554, 0
    %v608 = vsel %vm563, %v603, 0
    %610 = vmatpush.bf16.msra.mxu0 0
    %611 = vmatpush.bf16.msra.mxu0 0
    %612 = vmatpush.bf16.msra.mxu0 0
    %613 = vmatpush.bf16.msra.mxu0 0
    %614 = vmatpush.bf16.msra.mxu0 0
    %615 = vmatpush.bf16.msra.mxu0 0
    %616 = vmatpush.bf16.msra.mxu0 0
    %617 = vmatpush.bf16.msra.mxu0 %v608
    %618 = vmatmul.bf16.gmra.mxu0 %v605
    %v619 = vpop.f32.mrf.mxu0
    %v620 = vadd.f32 0.0, %v619
    %v621 = vpop.f32.mrf.mxu0
    %622 = vdwg.mxu0
    %v624 = vunpack.c.l.b16 %v259
    %v625 = vpack.c.b16 %v624, %v624
    %626 = vrot.lane.b32.xlu0 %v625, 96
    %v627 = vpop.permute.xlu0 %626
    %v629 = vsel %vm463, %v555, 0
    %v632 = vsel %vm563, %v627, 0
    %634 = vmatpush.bf16.msra.mxu0 0
    %635 = vmatpush.bf16.msra.mxu0 0
    %636 = vmatpush.bf16.msra.mxu0 0
    %637 = vmatpush.bf16.msra.mxu0 0
    %638 = vmatpush.bf16.msra.mxu0 0
    %639 = vmatpush.bf16.msra.mxu0 0
    %640 = vmatpush.bf16.msra.mxu0 0
    %641 = vmatpush.bf16.msra.mxu0 %v632
    %642 = vmatmul.bf16.gmra.mxu0 %v629
    %v643 = vpop.f32.mrf.mxu0
    %v644 = vadd.f32 0.0, %v643
    %v645 = vpop.f32.mrf.mxu0
    %646 = vdwg.mxu0
    %647 = vrot.lane.b32.xlu0 %v601, 64
    %v648 = vpop.permute.xlu0 %647
    %v650 = vsel %vm463, %v556, 0
    %v653 = vsel %vm563, %v648, 0
    %655 = vmatpush.bf16.msra.mxu0 0
    %656 = vmatpush.bf16.msra.mxu0 0
    %657 = vmatpush.bf16.msra.mxu0 0
    %658 = vmatpush.bf16.msra.mxu0 0
    %659 = vmatpush.bf16.msra.mxu0 0
    %660 = vmatpush.bf16.msra.mxu0 0
    %661 = vmatpush.bf16.msra.mxu0 0
    %662 = vmatpush.bf16.msra.mxu0 %v653
    %663 = vmatmul.bf16.gmra.mxu0 %v650
    %v664 = vpop.f32.mrf.mxu0
    %v665 = vadd.f32 0.0, %v664
    %v666 = vpop.f32.mrf.mxu0
    %667 = vdwg.mxu0
    %668 = vrot.lane.b32.xlu0 %v625, 64
    %v669 = vpop.permute.xlu0 %668
    %v671 = vsel %vm463, %v557, 0
    %v674 = vsel %vm563, %v669, 0
    %676 = vmatpush.bf16.msra.mxu0 0
    %677 = vmatpush.bf16.msra.mxu0 0
    %678 = vmatpush.bf16.msra.mxu0 0
    %679 = vmatpush.bf16.msra.mxu0 0
    %680 = vmatpush.bf16.msra.mxu0 0
    %681 = vmatpush.bf16.msra.mxu0 0
    %682 = vmatpush.bf16.msra.mxu0 0
    %683 = vmatpush.bf16.msra.mxu0 %v674
    %684 = vmatmul.bf16.gmra.mxu0 %v671
    %v685 = vpop.f32.mrf.mxu0
    %v686 = vadd.f32 0.0, %v685
    %v687 = vpop.f32.mrf.mxu0
    %688 = vdwg.mxu0
    %689 = vrot.lane.b32.xlu0 %v601, 32
    %v690 = vpop.permute.xlu0 %689
    %v692 = vsel %vm463, %v558, 0
    %v695 = vsel %vm563, %v690, 0
    %697 = vmatpush.bf16.msra.mxu0 0
    %698 = vmatpush.bf16.msra.mxu0 0
    %699 = vmatpush.bf16.msra.mxu0 0
    %700 = vmatpush.bf16.msra.mxu0 0
    %701 = vmatpush.bf16.msra.mxu0 0
    %702 = vmatpush.bf16.msra.mxu0 0
    %703 = vmatpush.bf16.msra.mxu0 0
    %704 = vmatpush.bf16.msra.mxu0 %v695
    %705 = vmatmul.bf16.gmra.mxu0 %v692
    %v706 = vpop.f32.mrf.mxu0
    %v707 = vadd.f32 0.0, %v706
    %v708 = vpop.f32.mrf.mxu0
    %709 = vdwg.mxu0
    %710 = vrot.lane.b32.xlu0 %v625, 32
    %v711 = vpop.permute.xlu0 %710
    %v713 = vsel %vm463, %v559, 0
    %v716 = vsel %vm563, %v711, 0
    %718 = vmatpush.bf16.msra.mxu0 0
    %719 = vmatpush.bf16.msra.mxu0 0
    %720 = vmatpush.bf16.msra.mxu0 0
    %721 = vmatpush.bf16.msra.mxu0 0
    %722 = vmatpush.bf16.msra.mxu0 0
    %723 = vmatpush.bf16.msra.mxu0 0
    %724 = vmatpush.bf16.msra.mxu0 0
    %725 = vmatpush.bf16.msra.mxu0 %v716
    %726 = vmatmul.bf16.gmra.mxu0 %v713
    %v727 = vpop.f32.mrf.mxu0
    %v728 = vadd.f32 0.0, %v727
    %v729 = vpop.f32.mrf.mxu0
    %730 = vdwg.mxu0
    %733 = vrot.lane.b32.xlu0 %v620, 32
    %v734 = vpop.permute.xlu0 %733
    %735 = vrot.lane.b32.xlu0 %v644, 32
    %v736 = vpop.permute.xlu0 %735
    %741 = vrot.lane.b32.xlu0 %v665, 64
    %v742 = vpop.permute.xlu0 %741
    %743 = vrot.lane.b32.xlu0 %v686, 64
    %v744 = vpop.permute.xlu0 %743
    %749 = vrot.lane.b32.xlu0 %v707, 96
    %v750 = vpop.permute.xlu0 %749
    %751 = vrot.lane.b32.xlu0 %v728, 96
    %v752 = vpop.permute.xlu0 %751
    %v755 = vsel %vm166, %v577, %v734
    %v756 = vsel %vm166, %v596, %v736
    %vm757 = vcmask 523264
    %v758 = vsel %vm757, %v755, %v742
    %v759 = vsel %vm757, %v756, %v744
    %vm760 = vcmask 785408
    %v761 = vsel %vm760, %v758, %v750
    %v762 = vsel %vm760, %v759, %v752
    %v763 = vpack.c.bf16 %v762, %v761
    %v764 = vld [vmem:[#allocation10] sm:$0xf]
    %v765 = vld [vmem:[#allocation10 + $0x4] sm:$0xf]
    %v766 = vld [vmem:[#allocation10 + $0x8] sm:$0xf]
    %v767 = vld [vmem:[#allocation10 + $0xc] sm:$0xf]
    %v768 = vld [vmem:[#allocation10 + $0x10] sm:$0xf]
    %v769 = vld [vmem:[#allocation10 + $0x14] sm:$0xf]
    %v770 = vld [vmem:[#allocation10 + $0x18] sm:$0xf]
    %v771 = vld [vmem:[#allocation10 + $0x1c] sm:$0xf]
    %v772 = vld [vmem:[#allocation10 + $0x20] sm:$0xf]
    %v773 = vld [vmem:[#allocation10 + $0x24] sm:$0xf]
    %v774 = vld [vmem:[#allocation10 + $0x28] sm:$0xf]
    %v775 = vld [vmem:[#allocation10 + $0x2c] sm:$0xf]
    %v776 = vld [vmem:[#allocation10 + $0x30] sm:$0xf]
    %v777 = vld [vmem:[#allocation10 + $0x34] sm:$0xf]
    %v778 = vld [vmem:[#allocation10 + $0x38] sm:$0xf]
    %v779 = vld [vmem:[#allocation10 + $0x3c] sm:$0xf]
    %v780 = vld [vmem:[%s5] sm:$0x1]
    %v782 = vperm.slane %v780, 0
    %v800 = vunpack.c.l.b16 %v764
    %v801 = vunpack.c.l.b16 %v765
    %v802 = vunpack.c.l.b16 %v766
    %v803 = vunpack.c.l.b16 %v767
    %v804 = vunpack.c.l.b16 %v768
    %v805 = vunpack.c.l.b16 %v769
    %v806 = vunpack.c.l.b16 %v770
    %v807 = vunpack.c.l.b16 %v771
    %v808 = vunpack.c.l.b16 %v772
    %v809 = vunpack.c.l.b16 %v773
    %v810 = vunpack.c.l.b16 %v774
    %v811 = vunpack.c.l.b16 %v775
    %v812 = vunpack.c.l.b16 %v776
    %v813 = vunpack.c.l.b16 %v777
    %v814 = vunpack.c.l.b16 %v778
    %v815 = vunpack.c.l.b16 %v779
    %v816 = vpack.c.b16 %v801, %v800
    %v817 = vpack.c.b16 %v803, %v802
    %v818 = vpack.c.b16 %v805, %v804
    %v819 = vpack.c.b16 %v807, %v806
    %v820 = vpack.c.b16 %v809, %v808
    %v821 = vpack.c.b16 %v811, %v810
    %v822 = vpack.c.b16 %v813, %v812
    %v823 = vpack.c.b16 %v815, %v814
    %832 = vmatpush.bf16.msra.mxu0 %v823
    %833 = vmatpush.bf16.msra.mxu0 %v822
    %834 = vmatpush.bf16.msra.mxu0 %v821
    %835 = vmatpush.bf16.msra.mxu0 %v820
    %836 = vmatpush.bf16.msra.mxu0 %v819
    %837 = vmatpush.bf16.msra.mxu0 %v818
    %838 = vmatpush.bf16.msra.mxu0 %v817
    %839 = vmatpush.bf16.msra.mxu0 %v816
    %840 = vmatmul.bf16.gmra.mxu0 %v763
    %v841 = vpop.f32.mrf.mxu0
    %v842 = vadd.f32 %v782, %v841
    %v843 = vpop.f32.mrf.mxu0
    %v844 = vadd.f32 %v782, %v843
    %845 = vdwg.mxu0
    %846 = vst [vmem:[#allocation11] sm:$0xff] %v842
    %847 = vst [vmem:[#allocation11 + $0x8] sm:$0xff] %v844
    // Predicated region
    $region46: #{tpu_custom_call.1} parent=1 // pred_check
      _
    $region47: #{tpu_custom_call.1} parent=1 // pred_check_branch
      %849 = sbr.rel (0) target = $region49
    $region48: #{tpu_custom_call.1} parent=1 // pred_region
      %851 = vsyncadd [#allocation4], 0
      %s852 = sshll.u32 [#allocation11], 4
      %s853 = int_to_ptr.vmem [resolvable:$true] %s852
      %s854 = sshll.u32 %s6, 4
      %s855 = int_to_ptr.hbm [resolvable:$true] %s854
      %860 = dma.vmem_to_hbm [thread:$0]  %s853, 256, %s855, [#allocation4], 128, 128, 8
    $region49: #{tpu_custom_call.1} parent=1 // pred_fallthru
      _
    // Predicated region
    $region50: #{tpu_custom_call.1} parent=1 // pred_check
      _
    $region51: #{tpu_custom_call.1} parent=1 // pred_check_branch
      %862 = sbr.rel (0) target = $region53
    $region52: #{tpu_custom_call.1} parent=1 // pred_region
      %864 = dma.done [#allocation4], 256
    $region53: #{tpu_custom_call.1} parent=1 // pred_fallthru
      _
    %865 = vsyncpa [#allocation3], 1
    %866 = vsyncpa [#allocation6], 1
    %867 = vsyncpa [#allocation9], 1
    %868 = vsyncpa [#allocation4], 1

</llo_original>
